<compile_context>
chip_gen: v7x
topology: tpu7x:2x2x1
jax: 0.10.0
libtpu: 0.0.40
codegen_flags: <defaults>
</compile_context>

<pallas_src>
import jax
import jax.numpy as jnp
from jax.experimental import pallas as pl
from jax.experimental.pallas import tpu as pltpu


def _round_up(n, m):
    return ((n + m - 1) // m) * m


def sae_kernel(x_ref,
               w1_ref, b1_ref,
               w2_ref, b2_ref,
               w3_ref, b3_ref,
               w4_ref, b4_ref,
               o_ref):
    # Matmul-input dtype (bf16 in the fast path); accumulate in f32 on the MXU.
    cdt = w1_ref.dtype

    def sigmoid(h):
        # 1 / (1 + exp(-h)): exp rides the EUP slot, approx reciprocal too.
        return pl.reciprocal(1.0 + jnp.exp(-h), approx=True)

    x = x_ref[...]

    h = jnp.dot(x, w1_ref[...], preferred_element_type=jnp.float32) + b1_ref[...]
    h = sigmoid(h)

    h = jnp.dot(h.astype(cdt), w2_ref[...], preferred_element_type=jnp.float32) + b2_ref[...]
    h = sigmoid(h)

    h = jnp.dot(h.astype(cdt), w3_ref[...], preferred_element_type=jnp.float32) + b3_ref[...]
    h = sigmoid(h)

    out = jnp.dot(h.astype(cdt), w4_ref[...], preferred_element_type=jnp.float32) + b4_ref[...]
    o_ref[...] = out.astype(o_ref.dtype)


def init_sae_params(key, nb_movies):
    """nn.Linear-style init U(-1/sqrt(fan_in), +1/sqrt(fan_in)).

    Weights are [in, out] (transpose of PyTorch's [out, in]); biases are [1, out].
    """
    dims = [(nb_movies, 20), (20, 10), (10, 20), (20, nb_movies)]
    params = []
    for (fan_in, fan_out) in dims:
        key, kw, kb = jax.random.split(key, 3)
        bound = 1.0 / jnp.sqrt(jnp.float32(fan_in))
        w = jax.random.uniform(kw, (fan_in, fan_out), jnp.float32, -bound, bound)
        b = jax.random.uniform(kb, (1, fan_out), jnp.float32, -bound, bound)
        params.append((w, b))
    return params


def sae_forward(x, params, *, compute_dtype=jnp.bfloat16, batch_tile=512):
    """Full SAE forward. x: [B, nb_movies] -> [B, nb_movies]."""
    B, F = x.shape
    out_dtype = x.dtype

    (w1, b1), (w2, b2), (w3, b3), (w4, b4) = params

    # --- Pad feature dim to a lane-dense multiple of 128 (zero pad is inert). ---
    F_pad = _round_up(F, 128)
    if F_pad != F:
        pad_f = F_pad - F
        x = jnp.pad(x, ((0, 0), (0, pad_f)))
        w1 = jnp.pad(w1, ((0, pad_f), (0, 0)))
        w4 = jnp.pad(w4, ((0, 0), (0, pad_f)))
        b4 = jnp.pad(b4, ((0, 0), (0, pad_f)))

    # --- Batch tiling: TB multiple of 8, batch zero-padded to a multiple of TB. ---
    TB = min(batch_tile, _round_up(B, 8))
    TB = _round_up(TB, 8)
    B_pad = _round_up(B, TB)
    if B_pad != B:
        x = jnp.pad(x, ((0, B_pad - B), (0, 0)))

    # --- Cast matmul inputs; keep biases (and accumulation) in f32. ---
    x = x.astype(compute_dtype)
    w1, w2, w3, w4 = (w.astype(compute_dtype) for w in (w1, w2, w3, w4))
    b1, b2, b3, b4 = (b.astype(jnp.float32) for b in (b1, b2, b3, b4))

    flat = [x, w1, b1, w2, b2, w3, b3, w4, b4]

    batch_spec_in = pl.BlockSpec((TB, F_pad), lambda i: (i, 0))
    batch_spec_out = pl.BlockSpec((TB, F_pad), lambda i: (i, 0))
    resident = lambda i: (0, 0)  # weights/biases: same block every step -> stay in VMEM
    in_specs = [batch_spec_in] + [pl.BlockSpec(a.shape, resident) for a in flat[1:]]

    out = pl.pallas_call(
        sae_kernel,
        out_shape=jax.ShapeDtypeStruct((B_pad, F_pad), out_dtype),
        grid=(B_pad // TB,),
        in_specs=in_specs,
        out_specs=batch_spec_out,
        compiler_params=pltpu.CompilerParams(
            dimension_semantics=("parallel",),
            vmem_limit_bytes=32 * 1024 * 1024,
        ),
    )(*flat)

    return out[:B, :F]


def sae_reference(x, params, compute_dtype=jnp.float32):
    """Pure-JAX reference with the same dtype policy as the kernel."""
    h = x
    for i, (w, b) in enumerate(params):
        h = jnp.dot(h.astype(compute_dtype), w.astype(compute_dtype),
                    preferred_element_type=jnp.float32) + b.astype(jnp.float32)
        if i < 3:
            h = jax.nn.sigmoid(h)
    return h


if __name__ == "__main__":
    key = jax.random.PRNGKey(0)
    nb_movies = 200   # synthetic "nb_movies" (not a multiple of 128 -> exercises padding)
    batch = 10        # not a multiple of 8 -> exercises batch padding

    key, kx, kp = jax.random.split(key, 3)
    x = jax.random.uniform(kx, (batch, nb_movies), jnp.float32, 0.0, 5.0)
    params = init_sae_params(kp, nb_movies)

    # f32 compute path: tight check against the f32 reference.
    out_f32 = jax.block_until_ready(
        sae_forward(x, params, compute_dtype=jnp.float32))
    ref_f32 = sae_reference(x, params, compute_dtype=jnp.float32)
    assert out_f32.shape == (batch, nb_movies)
    assert jnp.allclose(out_f32, ref_f32, atol=1e-2, rtol=1e-2)

    # bf16 matmul-input path (default, halves streamed HBM bytes): check against
    # a reference using the same bf16 cast policy.
    out_bf16 = jax.block_until_ready(sae_forward(x, params))
    ref_bf16 = sae_reference(x, params, compute_dtype=jnp.bfloat16)
    assert out_bf16.shape == (batch, nb_movies)
    assert jnp.allclose(out_bf16, ref_bf16, atol=5e-2, rtol=5e-2)

    print("KERNEL_OK")
</pallas_src>

<mosaic_0001>
module attributes {stable_mosaic.version = 11 : i64} {
  func.func @sae_kernel(%arg0: i32, %arg1: memref<16x256xf32, #tpu.memory_space<vmem>>, %arg2: memref<256x20xf32, #tpu.memory_space<vmem>>, %arg3: memref<1x20xf32, #tpu.memory_space<vmem>>, %arg4: memref<20x10xf32, #tpu.memory_space<vmem>>, %arg5: memref<1x10xf32, #tpu.memory_space<vmem>>, %arg6: memref<10x20xf32, #tpu.memory_space<vmem>>, %arg7: memref<1x20xf32, #tpu.memory_space<vmem>>, %arg8: memref<20x256xf32, #tpu.memory_space<vmem>>, %arg9: memref<1x256xf32, #tpu.memory_space<vmem>>, %arg10: memref<16x256xf32, #tpu.memory_space<vmem>>) attributes {dimension_semantics = [#tpu.dimension_semantics<parallel>], iteration_bounds = array<i64: 1>, scalar_prefetch = 0 : i64, scratch_operands = 0 : i64, tpu.core_type = #tpu.core_type<tc>, window_params = [{transform_indices = @transform_0, window_bounds = array<i64: 16, 256>}, {pipeline_mode = #tpu.pipeline_mode<synchronous>, transform_indices = @transform_1, window_bounds = array<i64: 256, 20>}, {pipeline_mode = #tpu.pipeline_mode<synchronous>, transform_indices = @transform_2, window_bounds = array<i64: 1, 20>}, {pipeline_mode = #tpu.pipeline_mode<synchronous>, transform_indices = @transform_3, window_bounds = array<i64: 20, 10>}, {pipeline_mode = #tpu.pipeline_mode<synchronous>, transform_indices = @transform_4, window_bounds = array<i64: 1, 10>}, {pipeline_mode = #tpu.pipeline_mode<synchronous>, transform_indices = @transform_5, window_bounds = array<i64: 10, 20>}, {pipeline_mode = #tpu.pipeline_mode<synchronous>, transform_indices = @transform_6, window_bounds = array<i64: 1, 20>}, {pipeline_mode = #tpu.pipeline_mode<synchronous>, transform_indices = @transform_7, window_bounds = array<i64: 20, 256>}, {pipeline_mode = #tpu.pipeline_mode<synchronous>, transform_indices = @transform_8, window_bounds = array<i64: 1, 256>}, {transform_indices = @transform_9, window_bounds = array<i64: 16, 256>}]} {
    %c0 = arith.constant 0 : index
    %c0_0 = arith.constant 0 : index
    %0 = vector.load %arg1[%c0, %c0_0] : memref<16x256xf32, #tpu.memory_space<vmem>>, vector<16x256xf32>
    %c0_1 = arith.constant 0 : index
    %c0_2 = arith.constant 0 : index
    %1 = vector.load %arg2[%c0_1, %c0_2] : memref<256x20xf32, #tpu.memory_space<vmem>>, vector<256x20xf32>
    %cst = arith.constant dense<0.000000e+00> : vector<16x20xf32>
    %2 = tpu.matmul %0, %1, %cst {dimension_numbers = #tpu.dot_dimension_numbers<[1], [0], [0], [1], [0, 0, 1, 1], [], []>} : vector<16x256xf32>, vector<256x20xf32>, vector<16x20xf32> -> vector<16x20xf32>
    %c0_3 = arith.constant 0 : index
    %c0_4 = arith.constant 0 : index
    %3 = vector.load %arg3[%c0_3, %c0_4] : memref<1x20xf32, #tpu.memory_space<vmem>>, vector<1x20xf32>
    %4 = vector.broadcast %3 : vector<1x20xf32> to vector<16x20xf32>
    %5 = arith.addf %2, %4 : vector<16x20xf32>
    %cst_5 = arith.constant 0.000000e+00 : f32
    %6 = vector.broadcast %cst_5 : f32 to vector<16x20xf32>
    %7 = arith.subf %6, %5 : vector<16x20xf32>
    %8 = math.exp %7 : vector<16x20xf32>
    %cst_6 = arith.constant 1.000000e+00 : f32
    %9 = vector.broadcast %cst_6 : f32 to vector<16x20xf32>
    %10 = arith.addf %9, %8 : vector<16x20xf32>
    %11 = tpu.reciprocal %10 {approx = true} : vector<16x20xf32> -> vector<16x20xf32>
    %c0_7 = arith.constant 0 : index
    %c0_8 = arith.constant 0 : index
    %12 = vector.load %arg4[%c0_7, %c0_8] : memref<20x10xf32, #tpu.memory_space<vmem>>, vector<20x10xf32>
    %cst_9 = arith.constant dense<0.000000e+00> : vector<16x10xf32>
    %13 = tpu.matmul %11, %12, %cst_9 {dimension_numbers = #tpu.dot_dimension_numbers<[1], [0], [0], [1], [0, 0, 1, 1], [], []>} : vector<16x20xf32>, vector<20x10xf32>, vector<16x10xf32> -> vector<16x10xf32>
    %c0_10 = arith.constant 0 : index
    %c0_11 = arith.constant 0 : index
    %14 = vector.load %arg5[%c0_10, %c0_11] : memref<1x10xf32, #tpu.memory_space<vmem>>, vector<1x10xf32>
    %15 = vector.broadcast %14 : vector<1x10xf32> to vector<16x10xf32>
    %16 = arith.addf %13, %15 : vector<16x10xf32>
    %cst_12 = arith.constant 0.000000e+00 : f32
    %17 = vector.broadcast %cst_12 : f32 to vector<16x10xf32>
    %18 = arith.subf %17, %16 : vector<16x10xf32>
    %19 = math.exp %18 : vector<16x10xf32>
    %cst_13 = arith.constant 1.000000e+00 : f32
    %20 = vector.broadcast %cst_13 : f32 to vector<16x10xf32>
    %21 = arith.addf %20, %19 : vector<16x10xf32>
    %22 = tpu.reciprocal %21 {approx = true} : vector<16x10xf32> -> vector<16x10xf32>
    %c0_14 = arith.constant 0 : index
    %c0_15 = arith.constant 0 : index
    %23 = vector.load %arg6[%c0_14, %c0_15] : memref<10x20xf32, #tpu.memory_space<vmem>>, vector<10x20xf32>
    %cst_16 = arith.constant dense<0.000000e+00> : vector<16x20xf32>
    %24 = tpu.matmul %22, %23, %cst_16 {dimension_numbers = #tpu.dot_dimension_numbers<[1], [0], [0], [1], [0, 0, 1, 1], [], []>} : vector<16x10xf32>, vector<10x20xf32>, vector<16x20xf32> -> vector<16x20xf32>
    %c0_17 = arith.constant 0 : index
    %c0_18 = arith.constant 0 : index
    %25 = vector.load %arg7[%c0_17, %c0_18] : memref<1x20xf32, #tpu.memory_space<vmem>>, vector<1x20xf32>
    %26 = vector.broadcast %25 : vector<1x20xf32> to vector<16x20xf32>
    %27 = arith.addf %24, %26 : vector<16x20xf32>
    %cst_19 = arith.constant 0.000000e+00 : f32
    %28 = vector.broadcast %cst_19 : f32 to vector<16x20xf32>
    %29 = arith.subf %28, %27 : vector<16x20xf32>
    %30 = math.exp %29 : vector<16x20xf32>
    %cst_20 = arith.constant 1.000000e+00 : f32
    %31 = vector.broadcast %cst_20 : f32 to vector<16x20xf32>
    %32 = arith.addf %31, %30 : vector<16x20xf32>
    %33 = tpu.reciprocal %32 {approx = true} : vector<16x20xf32> -> vector<16x20xf32>
    %c0_21 = arith.constant 0 : index
    %c0_22 = arith.constant 0 : index
    %34 = vector.load %arg8[%c0_21, %c0_22] : memref<20x256xf32, #tpu.memory_space<vmem>>, vector<20x256xf32>
    %cst_23 = arith.constant dense<0.000000e+00> : vector<16x256xf32>
    %35 = tpu.matmul %33, %34, %cst_23 {dimension_numbers = #tpu.dot_dimension_numbers<[1], [0], [0], [1], [0, 0, 1, 1], [], []>} : vector<16x20xf32>, vector<20x256xf32>, vector<16x256xf32> -> vector<16x256xf32>
    %c0_24 = arith.constant 0 : index
    %c0_25 = arith.constant 0 : index
    %36 = vector.load %arg9[%c0_24, %c0_25] : memref<1x256xf32, #tpu.memory_space<vmem>>, vector<1x256xf32>
    %37 = vector.broadcast %36 : vector<1x256xf32> to vector<16x256xf32>
    %38 = arith.addf %35, %37 : vector<16x256xf32>
    %c0_26 = arith.constant 0 : index
    %c0_27 = arith.constant 0 : index
    %39 = vector.load %arg10[%c0_26, %c0_27] : memref<16x256xf32, #tpu.memory_space<vmem>>, vector<16x256xf32>
    tpu.vector_store %arg10[%c0_26, %c0_27], %38 {strides = array<i32>} : memref<16x256xf32, #tpu.memory_space<vmem>>, vector<16x256xf32>,
    return
  }
  func.func @transform_0(%arg0: i32) -> (i32, i32) {
    %c0_i32 = arith.constant 0 : i32
    %c0_i32_0 = arith.constant 0 : i32
    return %arg0, %c0_i32 : i32, i32
  }
  func.func @transform_1(%arg0: i32) -> (i32, i32) {
    %c0_i32 = arith.constant 0 : i32
    %c0_i32_0 = arith.constant 0 : i32
    %c0_i32_1 = arith.constant 0 : i32
    return %c0_i32, %c0_i32_0 : i32, i32
  }
  func.func @transform_2(%arg0: i32) -> (i32, i32) {
    %c0_i32 = arith.constant 0 : i32
    %c0_i32_0 = arith.constant 0 : i32
    %c0_i32_1 = arith.constant 0 : i32
    return %c0_i32, %c0_i32_0 : i32, i32
  }
  func.func @transform_3(%arg0: i32) -> (i32, i32) {
    %c0_i32 = arith.constant 0 : i32
    %c0_i32_0 = arith.constant 0 : i32
    %c0_i32_1 = arith.constant 0 : i32
    return %c0_i32, %c0_i32_0 : i32, i32
  }
  func.func @transform_4(%arg0: i32) -> (i32, i32) {
    %c0_i32 = arith.constant 0 : i32
    %c0_i32_0 = arith.constant 0 : i32
    %c0_i32_1 = arith.constant 0 : i32
    return %c0_i32, %c0_i32_0 : i32, i32
  }
  func.func @transform_5(%arg0: i32) -> (i32, i32) {
    %c0_i32 = arith.constant 0 : i32
    %c0_i32_0 = arith.constant 0 : i32
    %c0_i32_1 = arith.constant 0 : i32
    return %c0_i32, %c0_i32_0 : i32, i32
  }
  func.func @transform_6(%arg0: i32) -> (i32, i32) {
    %c0_i32 = arith.constant 0 : i32
    %c0_i32_0 = arith.constant 0 : i32
    %c0_i32_1 = arith.constant 0 : i32
    return %c0_i32, %c0_i32_0 : i32, i32
  }
  func.func @transform_7(%arg0: i32) -> (i32, i32) {
    %c0_i32 = arith.constant 0 : i32
    %c0_i32_0 = arith.constant 0 : i32
    %c0_i32_1 = arith.constant 0 : i32
    return %c0_i32, %c0_i32_0 : i32, i32
  }
  func.func @transform_8(%arg0: i32) -> (i32, i32) {
    %c0_i32 = arith.constant 0 : i32
    %c0_i32_0 = arith.constant 0 : i32
    %c0_i32_1 = arith.constant 0 : i32
    return %c0_i32, %c0_i32_0 : i32, i32
  }
  func.func @transform_9(%arg0: i32) -> (i32, i32) {
    %c0_i32 = arith.constant 0 : i32
    %c0_i32_0 = arith.constant 0 : i32
    return %arg0, %c0_i32 : i32, i32
  }
}

</mosaic_0001>

<llo_original>
// kernel: tpu_custom_call.1
$region0: #{tpu_custom_call.1}
  #allocation0 [shape = 'u32[]', space=smem, size = 0x4, offset = 0x4, fixed_abs, tag = 'smem constant byte address 0x4 - core index']
  #allocation1 [shape = 'u32[144,128]{1,0:T(1,128)}', space=vmem, size = 0x12000, scoped, tag = 'internal scratch']
  %s0 = inlined_call_operand.vmem [shape: f32[16,256], index: 0, kind: input, shape index: {}]
  %s1 = inlined_call_operand.vmem [shape: f32[256,20], index: 1, kind: input, shape index: {}]
  %s2 = inlined_call_operand.vmem [shape: f32[1,20], index: 2, kind: input, shape index: {}]
  %s3 = inlined_call_operand.vmem [shape: f32[20,10], index: 3, kind: input, shape index: {}]
  %s4 = inlined_call_operand.vmem [shape: f32[1,10], index: 4, kind: input, shape index: {}]
  %s5 = inlined_call_operand.vmem [shape: f32[10,20], index: 5, kind: input, shape index: {}]
  %s6 = inlined_call_operand.vmem [shape: f32[1,20], index: 6, kind: input, shape index: {}]
  %s7 = inlined_call_operand.vmem [shape: f32[20,256], index: 7, kind: input, shape index: {}]
  %s8 = inlined_call_operand.vmem [shape: f32[1,256], index: 8, kind: input, shape index: {}]
  %s9 = inlined_call_operand.hbm [shape: f32[16,256], index: 9, kind: output, shape index: {}]
  %s10 = sld [smem:[#allocation0]]
  $region46: #{tpu_custom_call.1} parent=0
    _
  %s12 = ssub.s32 1, %s10
  %s13 = scalar_select 0, %s12, %s10
  $region1: #{tpu_custom_call.1} parent=0
    #allocation2 [shape = 'u8[16384]{0}', space=vmem, size = 0x4000, scoped, tag = 'output window, operand 0, single buffered']
    #allocation3 [shape = 's32[1]{0}', space=sflag, size = 0x4, scoped, tag = 'scoped memory for tpu_custom_call.1']
    %14 = vsyncpa [#allocation3], 0
    // Predicated region
    $region2: #{tpu_custom_call.1} parent=1 // pred_check
      _
    $region3: #{tpu_custom_call.1} parent=1 // pred_check_branch
      %16 = sbr.rel (0) target = $region5
    $region4: #{tpu_custom_call.1} parent=1 // pred_region
      _
    $region5: #{tpu_custom_call.1} parent=1 // pred_fallthru
      _
    // Predicated region
    $region6: #{tpu_custom_call.1} parent=1 // pred_check
      _
    $region7: #{tpu_custom_call.1} parent=1 // pred_check_branch
      %18 = sbr.rel (0) target = $region9
    $region8: #{tpu_custom_call.1} parent=1 // pred_region
      _
    $region9: #{tpu_custom_call.1} parent=1 // pred_fallthru
      _
    // Predicated region
    $region10: #{tpu_custom_call.1} parent=1 // pred_check
      _
    $region11: #{tpu_custom_call.1} parent=1 // pred_check_branch
      %20 = sbr.rel (0) target = $region13
    $region12: #{tpu_custom_call.1} parent=1 // pred_region
      _
    $region13: #{tpu_custom_call.1} parent=1 // pred_fallthru
      _
    // Predicated region
    $region14: #{tpu_custom_call.1} parent=1 // pred_check
      _
    $region15: #{tpu_custom_call.1} parent=1 // pred_check_branch
      %22 = sbr.rel (0) target = $region17
    $region16: #{tpu_custom_call.1} parent=1 // pred_region
      _
    $region17: #{tpu_custom_call.1} parent=1 // pred_fallthru
      _
    // Predicated region
    $region18: #{tpu_custom_call.1} parent=1 // pred_check
      _
    $region19: #{tpu_custom_call.1} parent=1 // pred_check_branch
      %24 = sbr.rel (0) target = $region21
    $region20: #{tpu_custom_call.1} parent=1 // pred_region
      _
    $region21: #{tpu_custom_call.1} parent=1 // pred_fallthru
      _
    // Predicated region
    $region22: #{tpu_custom_call.1} parent=1 // pred_check
      _
    $region23: #{tpu_custom_call.1} parent=1 // pred_check_branch
      %26 = sbr.rel (0) target = $region25
    $region24: #{tpu_custom_call.1} parent=1 // pred_region
      _
    $region25: #{tpu_custom_call.1} parent=1 // pred_fallthru
      _
    // Predicated region
    $region26: #{tpu_custom_call.1} parent=1 // pred_check
      _
    $region27: #{tpu_custom_call.1} parent=1 // pred_check_branch
      %28 = sbr.rel (0) target = $region29
    $region28: #{tpu_custom_call.1} parent=1 // pred_region
      _
    $region29: #{tpu_custom_call.1} parent=1 // pred_fallthru
      _
    // Predicated region
    $region30: #{tpu_custom_call.1} parent=1 // pred_check
      _
    $region31: #{tpu_custom_call.1} parent=1 // pred_check_branch
      %30 = sbr.rel (0) target = $region33
    $region32: #{tpu_custom_call.1} parent=1 // pred_region
      _
    $region33: #{tpu_custom_call.1} parent=1 // pred_fallthru
      _
    // Predicated region
    $region34: #{tpu_custom_call.1} parent=1 // pred_check
      _
    $region35: #{tpu_custom_call.1} parent=1 // pred_check_branch
      %32 = sbr.rel (0) target = $region37
    $region36: #{tpu_custom_call.1} parent=1 // pred_region
      _
    $region37: #{tpu_custom_call.1} parent=1 // pred_fallthru
      _
    %v33 = vld [vmem:[%s0] sm:$0xff]
    %v34 = vld [vmem:[%s0 + $0x8] sm:$0xff]
    %v35 = vld [vmem:[%s0 + $0x10] sm:$0xff]
    %v36 = vld [vmem:[%s0 + $0x18] sm:$0xff]
    %v37 = vld [vmem:[%s1] sm:$0xff]
    %v38 = vld [vmem:[%s1 + $0x8] sm:$0xff]
    %v39 = vld [vmem:[%s1 + $0x10] sm:$0xff]
    %v40 = vld [vmem:[%s1 + $0x18] sm:$0xff]
    %v41 = vld [vmem:[%s1 + $0x20] sm:$0xff]
    %v42 = vld [vmem:[%s1 + $0x28] sm:$0xff]
    %v43 = vld [vmem:[%s1 + $0x30] sm:$0xff]
    %v44 = vld [vmem:[%s1 + $0x38] sm:$0xff]
    %v45 = vld [vmem:[%s1 + $0x40] sm:$0xff]
    %v46 = vld [vmem:[%s1 + $0x48] sm:$0xff]
    %v47 = vld [vmem:[%s1 + $0x50] sm:$0xff]
    %v48 = vld [vmem:[%s1 + $0x58] sm:$0xff]
    %v49 = vld [vmem:[%s1 + $0x60] sm:$0xff]
    %v50 = vld [vmem:[%s1 + $0x68] sm:$0xff]
    %v51 = vld [vmem:[%s1 + $0x70] sm:$0xff]
    %v52 = vld [vmem:[%s1 + $0x78] sm:$0xff]
    %v53 = vld [vmem:[%s1 + $0x80] sm:$0xff]
    %v54 = vld [vmem:[%s1 + $0x88] sm:$0xff]
    %v55 = vld [vmem:[%s1 + $0x90] sm:$0xff]
    %v56 = vld [vmem:[%s1 + $0x98] sm:$0xff]
    %v57 = vld [vmem:[%s1 + $0xa0] sm:$0xff]
    %v58 = vld [vmem:[%s1 + $0xa8] sm:$0xff]
    %v59 = vld [vmem:[%s1 + $0xb0] sm:$0xff]
    %v60 = vld [vmem:[%s1 + $0xb8] sm:$0xff]
    %v61 = vld [vmem:[%s1 + $0xc0] sm:$0xff]
    %v62 = vld [vmem:[%s1 + $0xc8] sm:$0xff]
    %v63 = vld [vmem:[%s1 + $0xd0] sm:$0xff]
    %v64 = vld [vmem:[%s1 + $0xd8] sm:$0xff]
    %v65 = vld [vmem:[%s1 + $0xe0] sm:$0xff]
    %v66 = vld [vmem:[%s1 + $0xe8] sm:$0xff]
    %v67 = vld [vmem:[%s1 + $0xf0] sm:$0xff]
    %v68 = vld [vmem:[%s1 + $0xf8] sm:$0xff]
    %v69 = vld [vmem:[%s2] sm:$0x1]
    %v71 = vlaneseq
    %v72 = vshrl.u32 %v71, 7
    %v73 = vsub.s32 0, %v72
    %v74 = vrot.slane %v69, %v73
    %76 = vmatprep.subr.mxu0 0.0
    %77 = vmatpush1.msra.mxu0 %v37
    %78 = vmatprep.subr.mxu0 0.0
    %79 = vmatpush1.msra.mxu0 %v38
    %80 = vmatprep.subr.mxu0 0.0
    %81 = vmatpush1.msra.mxu0 %v39
    %82 = vmatprep.subr.mxu0 0.0
    %83 = vmatpush1.msra.mxu0 %v40
    %84 = vmatprep.subr.mxu0 0.0
    %85 = vmatpush1.msra.mxu0 %v41
    %86 = vmatprep.subr.mxu0 0.0
    %87 = vmatpush1.msra.mxu0 %v42
    %88 = vmatprep.subr.mxu0 0.0
    %89 = vmatpush1.msra.mxu0 %v43
    %90 = vmatprep.subr.mxu0 0.0
    %91 = vmatpush1.msra.mxu0 %v44
    %92 = vmatprep.subr.mxu0 0.0
    %93 = vmatpush1.msra.mxu0 %v45
    %94 = vmatprep.subr.mxu0 0.0
    %95 = vmatpush1.msra.mxu0 %v46
    %96 = vmatprep.subr.mxu0 0.0
    %97 = vmatpush1.msra.mxu0 %v47
    %98 = vmatprep.subr.mxu0 0.0
    %99 = vmatpush1.msra.mxu0 %v48
    %100 = vmatprep.subr.mxu0 0.0
    %101 = vmatpush1.msra.mxu0 %v49
    %102 = vmatprep.subr.mxu0 0.0
    %103 = vmatpush1.msra.mxu0 %v50
    %104 = vmatprep.subr.mxu0 0.0
    %105 = vmatpush1.msra.mxu0 %v51
    %106 = vmatprep.subr.mxu0 0.0
    %107 = vmatpush1.msra.mxu0 %v52
    %108 = vmatprep.subr.mxu0 0.0
    %109 = vmatpush1.msra.mxu0 %v53
    %110 = vmatprep.subr.mxu0 0.0
    %111 = vmatpush1.msra.mxu0 %v54
    %112 = vmatprep.subr.mxu0 0.0
    %113 = vmatpush1.msra.mxu0 %v55
    %114 = vmatprep.subr.mxu0 0.0
    %115 = vmatpush1.msra.mxu0 %v56
    %116 = vmatprep.subr.mxu0 0.0
    %117 = vmatpush1.msra.mxu0 %v57
    %118 = vmatprep.subr.mxu0 0.0
    %119 = vmatpush1.msra.mxu0 %v58
    %120 = vmatprep.subr.mxu0 0.0
    %121 = vmatpush1.msra.mxu0 %v59
    %122 = vmatprep.subr.mxu0 0.0
    %123 = vmatpush1.msra.mxu0 %v60
    %124 = vmatprep.subr.mxu0 0.0
    %125 = vmatpush1.msra.mxu0 %v61
    %126 = vmatprep.subr.mxu0 0.0
    %127 = vmatpush1.msra.mxu0 %v62
    %128 = vmatprep.subr.mxu0 0.0
    %129 = vmatpush1.msra.mxu0 %v63
    %130 = vmatprep.subr.mxu0 0.0
    %131 = vmatpush1.msra.mxu0 %v64
    %132 = vmatprep.subr.mxu0 0.0
    %133 = vmatpush1.msra.mxu0 %v65
    %134 = vmatprep.subr.mxu0 0.0
    %135 = vmatpush1.msra.mxu0 %v66
    %136 = vmatprep.subr.mxu0 0.0
    %137 = vmatpush1.msra.mxu0 %v67
    %138 = vmatprep.subr.mxu0 0.0
    %139 = vmatpush1.msra.mxu0 %v68
    %140 = vmatprep.mubr.f32.mxu0 %v34
    %141 = vmatmul.mubr.f32.gmra.mrb[0].mxu0 %v33
    %v142 = vpop.f32.mrb[0].mxu0
    %v143 = vadd.f32 %v74, %v142
    %v144 = vpop.f32.mrb[0].mxu0
    %145 = vmatprep.mubr.f32.mxu0 %v36
    %146 = vmatmul.mubr.f32.gmra.mrb[0].mxu0 %v35
    %v147 = vpop.f32.mrb[0].mxu0
    %v148 = vadd.f32 %v74, %v147
    %v149 = vpop.f32.mrb[0].mxu0
    %150 = vdwg.mxu0
    %v151 = vsub.f32 0.0, %v143
    %v152 = vsub.f32 0.0, %v148
    %v153 = vmul.f32 %v151, 1.442695
    %v154 = vpow.pop %v153
    %v155 = vmul.f32 %v152, 1.442695
    %v156 = vpow.pop %v155
    %v157 = vadd.f32 %v154, 1.0
    %v158 = vadd.f32 %v156, 1.0
    %v159 = vrcp.pop %v157
    %v160 = vrcp.pop %v158
    %v161 = vld [vmem:[%s3] sm:$0xff]
    %v162 = vld [vmem:[%s3 + $0x8] sm:$0xff]
    %v163 = vld [vmem:[%s3 + $0x10] sm:$0xf]
    %v164 = vld [vmem:[%s4] sm:$0x1]
    %v166 = vlaneseq
    %v167 = vshrl.u32 %v166, 7
    %v168 = vsub.s32 0, %v167
    %v169 = vrot.slane %v164, %v168
    %vm171 = vcmask 162816
    %v173 = vsel %vm171, %v159, 0
    %v176 = vsel %vm171, %v160, 0
    %vm178 = vcmask 1043456
    %v180 = vsel %vm178, %v163, 0
    %182 = vmatprep.subr.mxu0 0.0
    %183 = vmatpush1.msra.mxu0 %v161
    %184 = vmatprep.subr.mxu0 0.0
    %185 = vmatpush1.msra.mxu0 %v162
    %186 = vmatprep.subr.mxu0 0.0
    %187 = vmatpush1.msra.mxu0 %v180
    %188 = vmatprep.subr.mxu0 0.0
    %189 = vmatpush1.msra.mxu0 0.0
    %190 = vmatprep.subr.mxu0 0.0
    %191 = vmatpush1.msra.mxu0 0.0
    %192 = vmatprep.subr.mxu0 0.0
    %193 = vmatpush1.msra.mxu0 0.0
    %194 = vmatprep.subr.mxu0 0.0
    %195 = vmatpush1.msra.mxu0 0.0
    %196 = vmatprep.subr.mxu0 0.0
    %197 = vmatpush1.msra.mxu0 0.0
    %198 = vmatprep.subr.mxu0 0.0
    %199 = vmatpush1.msra.mxu0 0.0
    %200 = vmatprep.subr.mxu0 0.0
    %201 = vmatpush1.msra.mxu0 0.0
    %202 = vmatprep.subr.mxu0 0.0
    %203 = vmatpush1.msra.mxu0 0.0
    %204 = vmatprep.subr.mxu0 0.0
    %205 = vmatpush1.msra.mxu0 0.0
    %206 = vmatprep.subr.mxu0 0.0
    %207 = vmatpush1.msra.mxu0 0.0
    %208 = vmatprep.subr.mxu0 0.0
    %209 = vmatpush1.msra.mxu0 0.0
    %210 = vmatprep.subr.mxu0 0.0
    %211 = vmatpush1.msra.mxu0 0.0
    %212 = vmatprep.subr.mxu0 0.0
    %213 = vmatpush1.msra.mxu0 0.0
    %214 = vmatprep.subr.mxu0 0.0
    %215 = vmatpush1.msra.mxu0 0.0
    %216 = vmatprep.subr.mxu0 0.0
    %217 = vmatpush1.msra.mxu0 0.0
    %218 = vmatprep.subr.mxu0 0.0
    %219 = vmatpush1.msra.mxu0 0.0
    %220 = vmatprep.subr.mxu0 0.0
    %221 = vmatpush1.msra.mxu0 0.0
    %222 = vmatprep.subr.mxu0 0.0
    %223 = vmatpush1.msra.mxu0 0.0
    %224 = vmatprep.subr.mxu0 0.0
    %225 = vmatpush1.msra.mxu0 0.0
    %226 = vmatprep.subr.mxu0 0.0
    %227 = vmatpush1.msra.mxu0 0.0
    %228 = vmatprep.subr.mxu0 0.0
    %229 = vmatpush1.msra.mxu0 0.0
    %230 = vmatprep.subr.mxu0 0.0
    %231 = vmatpush1.msra.mxu0 0.0
    %232 = vmatprep.subr.mxu0 0.0
    %233 = vmatpush1.msra.mxu0 0.0
    %234 = vmatprep.subr.mxu0 0.0
    %235 = vmatpush1.msra.mxu0 0.0
    %236 = vmatprep.subr.mxu0 0.0
    %237 = vmatpush1.msra.mxu0 0.0
    %238 = vmatprep.subr.mxu0 0.0
    %239 = vmatpush1.msra.mxu0 0.0
    %240 = vmatprep.subr.mxu0 0.0
    %241 = vmatpush1.msra.mxu0 0.0
    %242 = vmatprep.subr.mxu0 0.0
    %243 = vmatpush1.msra.mxu0 0.0
    %244 = vmatprep.subr.mxu0 0.0
    %245 = vmatpush1.msra.mxu0 0.0
    %246 = vmatprep.mubr.f32.mxu0 0.0
    %247 = vmatmul.mubr.f32.gmra.mrb[0].mxu0 %v173
    %v248 = vpop.f32.mrb[0].mxu0
    %v249 = vadd.f32 %v169, %v248
    %v250 = vpop.f32.mrb[0].mxu0
    %251 = vmatprep.mubr.f32.mxu0 0.0
    %252 = vmatmul.mubr.f32.gmra.mrb[0].mxu0 %v176
    %v253 = vpop.f32.mrb[0].mxu0
    %v254 = vadd.f32 %v169, %v253
    %v255 = vpop.f32.mrb[0].mxu0
    %256 = vdwg.mxu0
    %v257 = vsub.f32 0.0, %v249
    %v258 = vsub.f32 0.0, %v254
    %v259 = vmul.f32 %v257, 1.442695
    %v260 = vpow.pop %v259
    %v261 = vmul.f32 %v258, 1.442695
    %v262 = vpow.pop %v261
    %v263 = vadd.f32 %v260, 1.0
    %v264 = vadd.f32 %v262, 1.0
    %v265 = vrcp.pop %v263
    %v266 = vrcp.pop %v264
    %v267 = vld [vmem:[%s5] sm:$0xff]
    %v268 = vld [vmem:[%s5 + $0x8] sm:$0x3]
    %v269 = vld [vmem:[%s6] sm:$0x1]
    %v271 = vlaneseq
    %v272 = vshrl.u32 %v271, 7
    %v273 = vsub.s32 0, %v272
    %v274 = vrot.slane %v269, %v273
    %vm276 = vcmask 80896
    %v278 = vsel %vm276, %v265, 0
    %v281 = vsel %vm276, %v266, 0
    %vm283 = vcmask 1041408
    %v285 = vsel %vm283, %v268, 0
    %287 = vmatprep.subr.mxu0 0.0
    %288 = vmatpush1.msra.mxu0 %v267
    %289 = vmatprep.subr.mxu0 0.0
    %290 = vmatpush1.msra.mxu0 %v285
    %291 = vmatprep.subr.mxu0 0.0
    %292 = vmatpush1.msra.mxu0 0.0
    %293 = vmatprep.subr.mxu0 0.0
    %294 = vmatpush1.msra.mxu0 0.0
    %295 = vmatprep.subr.mxu0 0.0
    %296 = vmatpush1.msra.mxu0 0.0
    %297 = vmatprep.subr.mxu0 0.0
    %298 = vmatpush1.msra.mxu0 0.0
    %299 = vmatprep.subr.mxu0 0.0
    %300 = vmatpush1.msra.mxu0 0.0
    %301 = vmatprep.subr.mxu0 0.0
    %302 = vmatpush1.msra.mxu0 0.0
    %303 = vmatprep.subr.mxu0 0.0
    %304 = vmatpush1.msra.mxu0 0.0
    %305 = vmatprep.subr.mxu0 0.0
    %306 = vmatpush1.msra.mxu0 0.0
    %307 = vmatprep.subr.mxu0 0.0
    %308 = vmatpush1.msra.mxu0 0.0
    %309 = vmatprep.subr.mxu0 0.0
    %310 = vmatpush1.msra.mxu0 0.0
    %311 = vmatprep.subr.mxu0 0.0
    %312 = vmatpush1.msra.mxu0 0.0
    %313 = vmatprep.subr.mxu0 0.0
    %314 = vmatpush1.msra.mxu0 0.0
    %315 = vmatprep.subr.mxu0 0.0
    %316 = vmatpush1.msra.mxu0 0.0
    %317 = vmatprep.subr.mxu0 0.0
    %318 = vmatpush1.msra.mxu0 0.0
    %319 = vmatprep.subr.mxu0 0.0
    %320 = vmatpush1.msra.mxu0 0.0
    %321 = vmatprep.subr.mxu0 0.0
    %322 = vmatpush1.msra.mxu0 0.0
    %323 = vmatprep.subr.mxu0 0.0
    %324 = vmatpush1.msra.mxu0 0.0
    %325 = vmatprep.subr.mxu0 0.0
    %326 = vmatpush1.msra.mxu0 0.0
    %327 = vmatprep.subr.mxu0 0.0
    %328 = vmatpush1.msra.mxu0 0.0
    %329 = vmatprep.subr.mxu0 0.0
    %330 = vmatpush1.msra.mxu0 0.0
    %331 = vmatprep.subr.mxu0 0.0
    %332 = vmatpush1.msra.mxu0 0.0
    %333 = vmatprep.subr.mxu0 0.0
    %334 = vmatpush1.msra.mxu0 0.0
    %335 = vmatprep.subr.mxu0 0.0
    %336 = vmatpush1.msra.mxu0 0.0
    %337 = vmatprep.subr.mxu0 0.0
    %338 = vmatpush1.msra.mxu0 0.0
    %339 = vmatprep.subr.mxu0 0.0
    %340 = vmatpush1.msra.mxu0 0.0
    %341 = vmatprep.subr.mxu0 0.0
    %342 = vmatpush1.msra.mxu0 0.0
    %343 = vmatprep.subr.mxu0 0.0
    %344 = vmatpush1.msra.mxu0 0.0
    %345 = vmatprep.subr.mxu0 0.0
    %346 = vmatpush1.msra.mxu0 0.0
    %347 = vmatprep.subr.mxu0 0.0
    %348 = vmatpush1.msra.mxu0 0.0
    %349 = vmatprep.subr.mxu0 0.0
    %350 = vmatpush1.msra.mxu0 0.0
    %351 = vmatprep.mubr.f32.mxu0 0.0
    %352 = vmatmul.mubr.f32.gmra.mrb[0].mxu0 %v278
    %v353 = vpop.f32.mrb[0].mxu0
    %v354 = vadd.f32 %v274, %v353
    %v355 = vpop.f32.mrb[0].mxu0
    %356 = vmatprep.mubr.f32.mxu0 0.0
    %357 = vmatmul.mubr.f32.gmra.mrb[0].mxu0 %v281
    %v358 = vpop.f32.mrb[0].mxu0
    %v359 = vadd.f32 %v274, %v358
    %v360 = vpop.f32.mrb[0].mxu0
    %361 = vdwg.mxu0
    %v362 = vsub.f32 0.0, %v354
    %v363 = vsub.f32 0.0, %v359
    %v364 = vmul.f32 %v362, 1.442695
    %v365 = vpow.pop %v364
    %v366 = vmul.f32 %v363, 1.442695
    %v367 = vpow.pop %v366
    %v368 = vadd.f32 %v365, 1.0
    %v369 = vadd.f32 %v367, 1.0
    %v370 = vrcp.pop %v368
    %v371 = vrcp.pop %v369
    %v372 = vld [vmem:[%s7] sm:$0xff]
    %v373 = vld [vmem:[%s7 + $0x8] sm:$0xff]
    %v374 = vld [vmem:[%s7 + $0x10] sm:$0xff]
    %v375 = vld [vmem:[%s7 + $0x18] sm:$0xff]
    %v376 = vld [vmem:[%s7 + $0x20] sm:$0xf]
    %v377 = vld [vmem:[%s7 + $0x28] sm:$0xf]
    %v378 = vld [vmem:[%s8] sm:$0x3]
    %v380 = vlaneseq
    %v381 = vshrl.u32 %v380, 7
    %v382 = vsub.s32 0, %v381
    %v383 = vrot.slane %v378, %v382
    %v384 = vlaneseq
    %v385 = vshrl.u32 %v384, 7
    %v386 = vsub.s32 1, %v385
    %v387 = vrot.slane %v378, %v386
    %v391 = vsel %vm171, %v370, 0
    %v394 = vsel %vm171, %v371, 0
    %v397 = vsel %vm178, %v376, 0
    %v400 = vsel %vm178, %v377, 0
    %402 = vmatprep.subr.mxu0 %v373
    %403 = vmatpush1.msra.mxu0 %v372
    %404 = vmatprep.subr.mxu0 %v375
    %405 = vmatpush1.msra.mxu0 %v374
    %406 = vmatprep.subr.mxu0 %v400
    %407 = vmatpush1.msra.mxu0 %v397
    %408 = vmatprep.subr.mxu0 0.0
    %409 = vmatpush1.msra.mxu0 0.0
    %410 = vmatprep.subr.mxu0 0.0
    %411 = vmatpush1.msra.mxu0 0.0
    %412 = vmatprep.subr.mxu0 0.0
    %413 = vmatpush1.msra.mxu0 0.0
    %414 = vmatprep.subr.mxu0 0.0
    %415 = vmatpush1.msra.mxu0 0.0
    %416 = vmatprep.subr.mxu0 0.0
    %417 = vmatpush1.msra.mxu0 0.0
    %418 = vmatprep.subr.mxu0 0.0
    %419 = vmatpush1.msra.mxu0 0.0
    %420 = vmatprep.subr.mxu0 0.0
    %421 = vmatpush1.msra.mxu0 0.0
    %422 = vmatprep.subr.mxu0 0.0
    %423 = vmatpush1.msra.mxu0 0.0
    %424 = vmatprep.subr.mxu0 0.0
    %425 = vmatpush1.msra.mxu0 0.0
    %426 = vmatprep.subr.mxu0 0.0
    %427 = vmatpush1.msra.mxu0 0.0
    %428 = vmatprep.subr.mxu0 0.0
    %429 = vmatpush1.msra.mxu0 0.0
    %430 = vmatprep.subr.mxu0 0.0
    %431 = vmatpush1.msra.mxu0 0.0
    %432 = vmatprep.subr.mxu0 0.0
    %433 = vmatpush1.msra.mxu0 0.0
    %434 = vmatprep.subr.mxu0 0.0
    %435 = vmatpush1.msra.mxu0 0.0
    %436 = vmatprep.subr.mxu0 0.0
    %437 = vmatpush1.msra.mxu0 0.0
    %438 = vmatprep.subr.mxu0 0.0
    %439 = vmatpush1.msra.mxu0 0.0
    %440 = vmatprep.subr.mxu0 0.0
    %441 = vmatpush1.msra.mxu0 0.0
    %442 = vmatprep.subr.mxu0 0.0
    %443 = vmatpush1.msra.mxu0 0.0
    %444 = vmatprep.subr.mxu0 0.0
    %445 = vmatpush1.msra.mxu0 0.0
    %446 = vmatprep.subr.mxu0 0.0
    %447 = vmatpush1.msra.mxu0 0.0
    %448 = vmatprep.subr.mxu0 0.0
    %449 = vmatpush1.msra.mxu0 0.0
    %450 = vmatprep.subr.mxu0 0.0
    %451 = vmatpush1.msra.mxu0 0.0
    %452 = vmatprep.subr.mxu0 0.0
    %453 = vmatpush1.msra.mxu0 0.0
    %454 = vmatprep.subr.mxu0 0.0
    %455 = vmatpush1.msra.mxu0 0.0
    %456 = vmatprep.subr.mxu0 0.0
    %457 = vmatpush1.msra.mxu0 0.0
    %458 = vmatprep.subr.mxu0 0.0
    %459 = vmatpush1.msra.mxu0 0.0
    %460 = vmatprep.subr.mxu0 0.0
    %461 = vmatpush1.msra.mxu0 0.0
    %462 = vmatprep.subr.mxu0 0.0
    %463 = vmatpush1.msra.mxu0 0.0
    %464 = vmatprep.subr.mxu0 0.0
    %465 = vmatpush1.msra.mxu0 0.0
    %466 = vmatprep.mubr.f32.mxu0 0.0
    %467 = vmatmul.mubr.f32.gmra.mrb[0].mxu0 %v391
    %v468 = vpop.f32.mrb[0].mxu0
    %v469 = vadd.f32 %v383, %v468
    %v470 = vpop.f32.mrb[0].mxu0
    %v471 = vadd.f32 %v387, %v470
    %472 = vmatprep.mubr.f32.mxu0 0.0
    %473 = vmatmul.mubr.f32.gmra.mrb[0].mxu0 %v394
    %v474 = vpop.f32.mrb[0].mxu0
    %v475 = vadd.f32 %v383, %v474
    %v476 = vpop.f32.mrb[0].mxu0
    %v477 = vadd.f32 %v387, %v476
    %478 = vdwg.mxu0
    %479 = vst [vmem:[#allocation2] sm:$0xff] %v469
    %480 = vst [vmem:[#allocation2 + $0x8] sm:$0xff] %v471
    %481 = vst [vmem:[#allocation2 + $0x10] sm:$0xff] %v475
    %482 = vst [vmem:[#allocation2 + $0x18] sm:$0xff] %v477
    // Predicated region
    $region38: #{tpu_custom_call.1} parent=1 // pred_check
      _
    $region39: #{tpu_custom_call.1} parent=1 // pred_check_branch
      %484 = sbr.rel (0) target = $region41
    $region40: #{tpu_custom_call.1} parent=1 // pred_region
      %s486 = ssub.s32 512, 512
      %487 = vsyncadd [#allocation3], %s486
      %s488 = sshll.u32 [#allocation2], 4
      %s489 = int_to_ptr.vmem [resolvable:$true] %s488
      %494 = dma.vmem_to_hbm [thread:$0]  %s489, 512, %s9, [#allocation3], 256, 256, 16
    $region41: #{tpu_custom_call.1} parent=1 // pred_fallthru
      _
    // Predicated region
    $region42: #{tpu_custom_call.1} parent=1 // pred_check
      _
    $region43: #{tpu_custom_call.1} parent=1 // pred_check_branch
      %496 = sbr.rel (0) target = $region45
    $region44: #{tpu_custom_call.1} parent=1 // pred_region
      %497 = dma.done [#allocation3], 512
    $region45: #{tpu_custom_call.1} parent=1 // pred_fallthru
      _
    %498 = vsyncpa [#allocation3], 1

</llo_original>
